<compile_context>
chip_gen: v6e
topology: v6e:2x2x1
jax: 0.10.0
libtpu: 0.0.40
codegen_flags: <defaults>
</compile_context>

<pallas_src>
import functools
import math

import jax
import jax.numpy as jnp
from jax.experimental import pallas as pl
from jax.experimental.pallas import tpu as pltpu


# ----------------------------------------------------------------------------- helpers

def _round_up(n, m):
    return ((n + m - 1) // m) * m


def _pad_rows(a, mp):
    m = a.shape[0]
    if m == mp:
        return a
    return jnp.pad(a, ((0, mp - m), (0, 0)))


def _const_spec(block_shape, index_map, buffers):
    """BlockSpec for operands whose block index never changes (weights/biases).

    With buffers == 1 the second pipeline buffer (pure VMEM waste for constant
    operands) is dropped.  buffers == 2 falls back to default double buffering.
    """
    if buffers == 2:
        return pl.BlockSpec(block_shape, index_map)
    return pl.BlockSpec(block_shape, index_map, pipeline_mode=pl.Buffered(buffers))


def _layer_norm(x, alpha, beta, eps):
    # Matches the PyTorch module: unbiased std, divide by (std + eps).
    n = x.shape[-1]
    mean = jnp.mean(x, axis=-1, keepdims=True)
    xc = x - mean
    var = jnp.sum(xc * xc, axis=-1, keepdims=True) / (n - 1)
    return alpha * (xc / (jnp.sqrt(var) + eps)) + beta


# ----------------------------------------------------------------------------- kernels

def ln_qkv_kernel(x_ref, alpha_ref, beta_ref, w_ref, b_ref, o_ref, *, eps):
    x = x_ref[...].astype(jnp.float32)
    ln = _layer_norm(x, alpha_ref[...].astype(jnp.float32),
                     beta_ref[...].astype(jnp.float32), eps)
    qkv = jnp.dot(ln.astype(w_ref.dtype), w_ref[...],
                  preferred_element_type=jnp.float32)
    o_ref[...] = (qkv + b_ref[...].astype(jnp.float32)).astype(o_ref.dtype)


def attention_kernel(q_ref, k_ref, v_ref, mask_ref, o_ref, *, scale):
    # Refs are squeezed to (S, d_k) / (S, S) per (batch, head) grid point.
    # TODO(synk): for long sequences replace with a kv-tiled flash-attention kernel.
    q = q_ref[...].astype(jnp.float32)
    k = k_ref[...].astype(jnp.float32)
    s = jnp.dot(q, k.T, preferred_element_type=jnp.float32) * scale
    s = jnp.where(mask_ref[...] == 0, -1e9, s)
    s = s - jnp.max(s, axis=-1, keepdims=True)
    p = jnp.exp(s)
    p = p / jnp.sum(p, axis=-1, keepdims=True)
    # TODO(synk): attention dropout skipped (identity in eval mode).
    o = jnp.dot(p.astype(v_ref.dtype), v_ref[...], preferred_element_type=jnp.float32)
    o_ref[...] = o.astype(o_ref.dtype)


def out_proj_residual_kernel(ctx_ref, res_ref, w_ref, b_ref, o_ref):
    y = jnp.dot(ctx_ref[...].astype(w_ref.dtype), w_ref[...],
                preferred_element_type=jnp.float32)
    y = y + b_ref[...].astype(jnp.float32) + res_ref[...].astype(jnp.float32)
    o_ref[...] = y.astype(o_ref.dtype)


def ln_ffn_residual_kernel(x_ref, alpha_ref, beta_ref, w1_ref, b1_ref,
                           w2_ref, b2_ref, o_ref, acc_ref, ln_ref, *, eps):
    kidx = pl.program_id(1)

    @pl.when(kidx == 0)
    def _():
        x = x_ref[...].astype(jnp.float32)
        ln = _layer_norm(x, alpha_ref[...].astype(jnp.float32),
                         beta_ref[...].astype(jnp.float32), eps)
        ln_ref[...] = ln.astype(ln_ref.dtype)
        acc_ref[...] = jnp.zeros_like(acc_ref)

    # k-th d_ff slice: b1 is added only to this slice; b2 only at finalize.
    h = jnp.dot(ln_ref[...], w1_ref[...], preferred_element_type=jnp.float32)
    h = jnp.maximum(h + b1_ref[...].astype(jnp.float32), 0.0)
    # TODO(synk): FFN dropout skipped (identity in eval mode); training dropout
    # would use pltpu.prng_seed / pltpu.prng_random_bits here.
    acc_ref[...] += jnp.dot(h.astype(w2_ref.dtype), w2_ref[...],
                            preferred_element_type=jnp.float32)

    @pl.when(kidx == pl.num_programs(1) - 1)
    def _():
        y = acc_ref[...] + b2_ref[...].astype(jnp.float32) + x_ref[...].astype(jnp.float32)
        o_ref[...] = y.astype(o_ref.dtype)


# ----------------------------------------------------------------------------- wrapper

def encoder_layer(x, mask, params, *, h, eps=1e-6, tm=256, tk_ff=512,
                  compute_dtype=None, const_buffers=1):
    """x: [B, S, d_model]; mask: broadcastable to [B, 1, S, S] (0 == masked out).

    Weights in `params` are stored pre-transposed as [in_features, out_features].
    `compute_dtype=jnp.bfloat16` casts the matmul operands (f32 accumulation kept)
    for peak MXU throughput; default keeps the input dtype.
    """
    B, S, d_model = x.shape
    assert d_model % h == 0, "d_model is not divisible by h"
    d_k = d_model // h
    d_ff = params["w1"].shape[1]
    cdt = jnp.dtype(compute_dtype) if compute_dtype is not None else x.dtype
    f32 = jnp.float32

    # Row tiling: large MXU-shaped tile, padded so M divides evenly.
    M = B * S
    tm = min(tm, _round_up(M, 16))
    Mp = _round_up(M, tm)
    n_row_tiles = Mp // tm

    # d_ff (reduction) tiling for the FFN.
    tk = tk_ff if (tk_ff < d_ff and d_ff % tk_ff == 0) else d_ff
    if tk < d_ff:
        assert tk % 128 == 0, "d_ff tile must be a multiple of 128"
    n_k_tiles = d_ff // tk

    # ---- parameter packing ----
    w_qkv = jnp.concatenate([params["wq"], params["wk"], params["wv"]], axis=1).astype(cdt)
    b_qkv = jnp.concatenate([params["bq"], params["bk"], params["bv"]]).reshape(1, 3 * d_model).astype(f32)
    ln1_a = params["ln1_alpha"].reshape(1, d_model).astype(f32)
    ln1_b = params["ln1_beta"].reshape(1, d_model).astype(f32)
    ln2_a = params["ln2_alpha"].reshape(1, d_model).astype(f32)
    ln2_b = params["ln2_beta"].reshape(1, d_model).astype(f32)
    wo_c = params["wo"].astype(cdt)
    bo_2 = params["bo"].reshape(1, d_model).astype(f32)
    w1_c = params["w1"].astype(cdt)
    b1_2 = params["b1"].reshape(1, d_ff).astype(f32)
    w2_c = params["w2"].astype(cdt)
    b2_2 = params["b2"].reshape(1, d_model).astype(f32)

    isz_c = jnp.dtype(cdt).itemsize
    isz_x = jnp.dtype(x.dtype).itemsize

    x2 = x.reshape(M, d_model)
    x2p = _pad_rows(x2, Mp)

    # ---- 1) LN1 + fused Q|K|V projection ----
    qkv = pl.pallas_call(
        functools.partial(ln_qkv_kernel, eps=eps),
        out_shape=jax.ShapeDtypeStruct((Mp, 3 * d_model), x.dtype),
        grid_spec=pltpu.PrefetchScalarGridSpec(
            num_scalar_prefetch=0,
            grid=(n_row_tiles,),
            in_specs=[
                pl.BlockSpec((tm, d_model), lambda i: (i, 0)),
                _const_spec((1, d_model), lambda i: (0, 0), const_buffers),
                _const_spec((1, d_model), lambda i: (0, 0), const_buffers),
                _const_spec((d_model, 3 * d_model), lambda i: (0, 0), const_buffers),
                _const_spec((1, 3 * d_model), lambda i: (0, 0), const_buffers),
            ],
            out_specs=pl.BlockSpec((tm, 3 * d_model), lambda i: (i, 0)),
        ),
        compiler_params=pltpu.CompilerParams(dimension_semantics=("parallel",)),
        cost_estimate=pl.CostEstimate(
            flops=int(2 * Mp * d_model * 3 * d_model),
            transcendentals=0,
            bytes_accessed=int(Mp * d_model * isz_x
                               + 3 * d_model * d_model * isz_c
                               + Mp * 3 * d_model * isz_x)),
    )(x2p, ln1_a, ln1_b, w_qkv, b_qkv)

    # ---- split heads (cheap layout ops at the JAX level) ----
    qkv = qkv[:M]
    q2, k2, v2 = jnp.split(qkv, 3, axis=-1)

    def to_heads(t):
        return t.reshape(B, S, h, d_k).transpose(0, 2, 1, 3)  # (B, h, S, d_k)

    qh, kh, vh = to_heads(q2), to_heads(k2), to_heads(v2)
    maskb = jnp.broadcast_to(mask, (B, 1, S, S)).astype(jnp.int32)

    # ---- 2) scaled dot-product attention per (batch, head) ----
    ctx = pl.pallas_call(
        functools.partial(attention_kernel, scale=1.0 / math.sqrt(d_k)),
        out_shape=jax.ShapeDtypeStruct((B, h, S, d_k), x.dtype),
        grid_spec=pltpu.PrefetchScalarGridSpec(
            num_scalar_prefetch=0,
            grid=(B, h),
            in_specs=[
                pl.BlockSpec((None, None, S, d_k), lambda b, hh: (b, hh, 0, 0)),
                pl.BlockSpec((None, None, S, d_k), lambda b, hh: (b, hh, 0, 0)),
                pl.BlockSpec((None, None, S, d_k), lambda b, hh: (b, hh, 0, 0)),
                pl.BlockSpec((None, None, S, S), lambda b, hh: (b, 0, 0, 0)),
            ],
            out_specs=pl.BlockSpec((None, None, S, d_k), lambda b, hh: (b, hh, 0, 0)),
        ),
        compiler_params=pltpu.CompilerParams(
            dimension_semantics=("parallel", "parallel")),
    )(qh.astype(cdt), kh.astype(cdt), vh.astype(cdt), maskb)

    ctx2 = ctx.transpose(0, 2, 1, 3).reshape(M, d_model)
    ctx2p = _pad_rows(ctx2, Mp)

    # ---- 3) output projection + first residual ----
    y1 = pl.pallas_call(
        out_proj_residual_kernel,
        out_shape=jax.ShapeDtypeStruct((Mp, d_model), x.dtype),
        grid_spec=pltpu.PrefetchScalarGridSpec(
            num_scalar_prefetch=0,
            grid=(n_row_tiles,),
            in_specs=[
                pl.BlockSpec((tm, d_model), lambda i: (i, 0)),
                pl.BlockSpec((tm, d_model), lambda i: (i, 0)),
                _const_spec((d_model, d_model), lambda i: (0, 0), const_buffers),
                _const_spec((1, d_model), lambda i: (0, 0), const_buffers),
            ],
            out_specs=pl.BlockSpec((tm, d_model), lambda i: (i, 0)),
        ),
        compiler_params=pltpu.CompilerParams(dimension_semantics=("parallel",)),
        cost_estimate=pl.CostEstimate(
            flops=int(2 * Mp * d_model * d_model),
            transcendentals=0,
            bytes_accessed=int(2 * Mp * d_model * isz_x
                               + d_model * d_model * isz_c
                               + Mp * d_model * isz_x)),
    )(ctx2p, x2p, wo_c, bo_2)

    # ---- 4) LN2 + FFN (d_ff tiled on grid axis 1) + second residual ----
    # NOTE: for very large d_model/d_ff also raise vmem_limit_bytes (v6e) or
    # shrink tk (v7x, 64 MiB VMEM); defaults keep weight residency to 2*tk*d_model.
    y2 = pl.pallas_call(
        functools.partial(ln_ffn_residual_kernel, eps=eps),
        out_shape=jax.ShapeDtypeStruct((Mp, d_model), x.dtype),
        grid_spec=pltpu.PrefetchScalarGridSpec(
            num_scalar_prefetch=0,
            grid=(n_row_tiles, n_k_tiles),
            in_specs=[
                pl.BlockSpec((tm, d_model), lambda i, kk: (i, 0)),
                _const_spec((1, d_model), lambda i, kk: (0, 0), const_buffers),
                _const_spec((1, d_model), lambda i, kk: (0, 0), const_buffers),
                pl.BlockSpec((d_model, tk), lambda i, kk: (0, kk)),
                pl.BlockSpec((1, tk), lambda i, kk: (0, kk)),
                pl.BlockSpec((tk, d_model), lambda i, kk: (kk, 0)),
                _const_spec((1, d_model), lambda i, kk: (0, 0), const_buffers),
            ],
            out_specs=pl.BlockSpec((tm, d_model), lambda i, kk: (i, 0)),
            scratch_shapes=[pltpu.VMEM((tm, d_model), jnp.float32),  # accumulator
                            pltpu.VMEM((tm, d_model), cdt)],         # LN2(x) cache
        ),
        compiler_params=pltpu.CompilerParams(
            dimension_semantics=("parallel", "arbitrary")),
        cost_estimate=pl.CostEstimate(
            flops=int(4 * Mp * d_model * d_ff),
            transcendentals=0,
            bytes_accessed=int(2 * Mp * d_model * isz_x
                               + 2 * d_model * d_ff * isz_c)),
    )(y1, ln2_a, ln2_b, w1_c, b1_2, w2_c, b2_2)

    return y2[:M].reshape(B, S, d_model)


# ----------------------------------------------------------------------------- reference + init

def reference_encoder_layer(x, mask, params, *, h, eps=1e-6):
    B, S, d_model = x.shape
    d_k = d_model // h

    def layer_norm(t, alpha, beta):
        mean = jnp.mean(t, axis=-1, keepdims=True)
        std = jnp.std(t, axis=-1, keepdims=True, ddof=1)   # unbiased, like torch.std
        return alpha * (t - mean) / (std + eps) + beta

    def linear(t, w, b):
        return t @ w + b

    def heads(t):
        return t.reshape(B, S, h, d_k).transpose(0, 2, 1, 3)

    n1 = layer_norm(x, params["ln1_alpha"], params["ln1_beta"])
    q = heads(linear(n1, params["wq"], params["bq"]))
    k = heads(linear(n1, params["wk"], params["bk"]))
    v = heads(linear(n1, params["wv"], params["bv"]))
    scores = (q @ k.transpose(0, 1, 3, 2)) / math.sqrt(d_k)
    scores = jnp.where(mask == 0, -1e9, scores)
    probs = jax.nn.softmax(scores, axis=-1)
    ctx = (probs @ v).transpose(0, 2, 1, 3).reshape(B, S, d_model)
    x = x + linear(ctx, params["wo"], params["bo"])
    n2 = layer_norm(x, params["ln2_alpha"], params["ln2_beta"])
    ffn = linear(jnp.maximum(linear(n2, params["w1"], params["b1"]), 0.0),
                 params["w2"], params["b2"])
    return x + ffn


def init_linear(key, fan_in, fan_out, dtype=jnp.float32):
    """Mimic nn.Linear default init: U(-1/sqrt(in), 1/sqrt(in)); stored as [in, out]."""
    kw, kb = jax.random.split(key)
    bound = 1.0 / math.sqrt(fan_in)
    w = jax.random.uniform(kw, (fan_in, fan_out), dtype, minval=-bound, maxval=bound)
    b = jax.random.uniform(kb, (fan_out,), dtype, minval=-bound, maxval=bound)
    return w, b


# ----------------------------------------------------------------------------- main

if __name__ == "__main__":
    key = jax.random.PRNGKey(0)
    keys = jax.random.split(key, 7)

    B, S, d_model, h, d_ff = 2, 8, 32, 4, 64

    x = jax.random.normal(keys[0], (B, S, d_model), jnp.float32)
    wq, bq = init_linear(keys[1], d_model, d_model)
    wk, bk = init_linear(keys[2], d_model, d_model)
    wv, bv = init_linear(keys[3], d_model, d_model)
    wo, bo = init_linear(keys[4], d_model, d_model)
    w1, b1 = init_linear(keys[5], d_model, d_ff)
    w2, b2 = init_linear(keys[6], d_ff, d_model)

    params = dict(
        ln1_alpha=jnp.ones((d_model,), jnp.float32),
        ln1_beta=jnp.zeros((d_model,), jnp.float32),
        ln2_alpha=jnp.ones((d_model,), jnp.float32),
        ln2_beta=jnp.zeros((d_model,), jnp.float32),
        wq=wq, bq=bq, wk=wk, bk=bk, wv=wv, bv=bv, wo=wo, bo=bo,
        w1=w1, b1=b1, w2=w2, b2=b2,
    )

    # Mask with zeros to exercise the masked_fill path (0 == masked).
    mask = jnp.broadcast_to(jnp.tril(jnp.ones((S, S), jnp.int32)), (B, 1, S, S))

    try:
        y = jax.block_until_ready(encoder_layer(x, mask, params, h=h, const_buffers=1))
    except Exception:
        # Fallback for JAX builds that reject single-buffered (Buffered(1)) constant
        # operands; use default double buffering instead.
        y = jax.block_until_ready(encoder_layer(x, mask, params, h=h, const_buffers=2))

    y_ref = reference_encoder_layer(x, mask, params, h=h)
    assert y.shape == (B, S, d_model)
    max_diff = float(jnp.max(jnp.abs(y - y_ref)))
    assert max_diff < 5e-3, f"mismatch vs reference, max|diff|={max_diff}"

    print("KERNEL_OK")
</pallas_src>

<mosaic_0001>
module attributes {stable_mosaic.version = 11 : i64} {
  func.func @ln_qkv_kernel(%arg0: i32, %arg1: memref<16x32xf32, #tpu.memory_space<vmem>>, %arg2: memref<1x32xf32, #tpu.memory_space<vmem>>, %arg3: memref<1x32xf32, #tpu.memory_space<vmem>>, %arg4: memref<32x96xf32, #tpu.memory_space<vmem>>, %arg5: memref<1x96xf32, #tpu.memory_space<vmem>>, %arg6: memref<16x96xf32, #tpu.memory_space<vmem>>) attributes {dimension_semantics = [#tpu.dimension_semantics<parallel>], iteration_bounds = array<i64: 1>, scalar_prefetch = 0 : i64, scratch_operands = 0 : i64, tpu.core_type = #tpu.core_type<tc>, window_params = [{transform_indices = @transform_0, window_bounds = array<i64: 16, 32>}, {pipeline_mode = #tpu.pipeline_mode<synchronous>, transform_indices = @transform_1, window_bounds = array<i64: 1, 32>}, {pipeline_mode = #tpu.pipeline_mode<synchronous>, transform_indices = @transform_2, window_bounds = array<i64: 1, 32>}, {pipeline_mode = #tpu.pipeline_mode<synchronous>, transform_indices = @transform_3, window_bounds = array<i64: 32, 96>}, {pipeline_mode = #tpu.pipeline_mode<synchronous>, transform_indices = @transform_4, window_bounds = array<i64: 1, 96>}, {transform_indices = @transform_5, window_bounds = array<i64: 16, 96>}]} {
    %c0 = arith.constant 0 : index
    %c0_0 = arith.constant 0 : index
    %0 = vector.load %arg1[%c0, %c0_0] : memref<16x32xf32, #tpu.memory_space<vmem>>, vector<16x32xf32>
    %c0_1 = arith.constant 0 : index
    %c0_2 = arith.constant 0 : index
    %1 = vector.load %arg2[%c0_1, %c0_2] : memref<1x32xf32, #tpu.memory_space<vmem>>, vector<1x32xf32>
    %c0_3 = arith.constant 0 : index
    %c0_4 = arith.constant 0 : index
    %2 = vector.load %arg3[%c0_3, %c0_4] : memref<1x32xf32, #tpu.memory_space<vmem>>, vector<1x32xf32>
    %cst = arith.constant dense<0.000000e+00> : vector<16xf32>
    %3 = vector.multi_reduction <add>, %0, %cst [1] : vector<16x32xf32> to vector<16xf32>
    %4 = vector.shape_cast %3 : vector<16xf32> to vector<16x1xf32>
    %cst_5 = arith.constant 3.200000e+01 : f32
    %5 = vector.broadcast %cst_5 : f32 to vector<16x1xf32>
    %6 = arith.divf %4, %5 : vector<16x1xf32>
    %7 = vector.broadcast %6 : vector<16x1xf32> to vector<16x32xf32>
    %8 = arith.subf %0, %7 : vector<16x32xf32>
    %9 = arith.mulf %8, %8 : vector<16x32xf32>
    %cst_6 = arith.constant dense<0.000000e+00> : vector<16xf32>
    %10 = vector.multi_reduction <add>, %9, %cst_6 [1] : vector<16x32xf32> to vector<16xf32>
    %11 = vector.shape_cast %10 : vector<16xf32> to vector<16x1xf32>
    %cst_7 = arith.constant 3.100000e+01 : f32
    %12 = vector.broadcast %cst_7 : f32 to vector<16x1xf32>
    %13 = arith.divf %11, %12 : vector<16x1xf32>
    %14 = math.sqrt %13 : vector<16x1xf32>
    %cst_8 = arith.constant 9.99999997E-7 : f32
    %15 = vector.broadcast %cst_8 : f32 to vector<16x1xf32>
    %16 = arith.addf %14, %15 : vector<16x1xf32>
    %17 = vector.broadcast %16 : vector<16x1xf32> to vector<16x32xf32>
    %18 = arith.divf %8, %17 : vector<16x32xf32>
    %19 = vector.broadcast %1 : vector<1x32xf32> to vector<16x32xf32>
    %20 = arith.mulf %19, %18 : vector<16x32xf32>
    %21 = vector.broadcast %2 : vector<1x32xf32> to vector<16x32xf32>
    %22 = arith.addf %20, %21 : vector<16x32xf32>
    %c0_9 = arith.constant 0 : index
    %c0_10 = arith.constant 0 : index
    %23 = vector.load %arg4[%c0_9, %c0_10] : memref<32x96xf32, #tpu.memory_space<vmem>>, vector<32x96xf32>
    %cst_11 = arith.constant dense<0.000000e+00> : vector<16x96xf32>
    %24 = tpu.matmul %22, %23, %cst_11 {dimension_numbers = #tpu.dot_dimension_numbers<[1], [0], [0], [1], [0, 0, 1, 1], [], []>} : vector<16x32xf32>, vector<32x96xf32>, vector<16x96xf32> -> vector<16x96xf32>
    %c0_12 = arith.constant 0 : index
    %c0_13 = arith.constant 0 : index
    %25 = vector.load %arg5[%c0_12, %c0_13] : memref<1x96xf32, #tpu.memory_space<vmem>>, vector<1x96xf32>
    %26 = vector.broadcast %25 : vector<1x96xf32> to vector<16x96xf32>
    %27 = arith.addf %24, %26 : vector<16x96xf32>
    %c0_14 = arith.constant 0 : index
    %c0_15 = arith.constant 0 : index
    %28 = vector.load %arg6[%c0_14, %c0_15] : memref<16x96xf32, #tpu.memory_space<vmem>>, vector<16x96xf32>
    tpu.vector_store %arg6[%c0_14, %c0_15], %27 {strides = array<i32>} : memref<16x96xf32, #tpu.memory_space<vmem>>, vector<16x96xf32>,
    return
  }
  func.func @transform_0(%arg0: i32) -> (i32, i32) {
    %c0_i32 = arith.constant 0 : i32
    %c0_i32_0 = arith.constant 0 : i32
    return %arg0, %c0_i32 : i32, i32
  }
  func.func @transform_1(%arg0: i32) -> (i32, i32) {
    %c0_i32 = arith.constant 0 : i32
    %c0_i32_0 = arith.constant 0 : i32
    %c0_i32_1 = arith.constant 0 : i32
    return %c0_i32, %c0_i32_0 : i32, i32
  }
  func.func @transform_2(%arg0: i32) -> (i32, i32) {
    %c0_i32 = arith.constant 0 : i32
    %c0_i32_0 = arith.constant 0 : i32
    %c0_i32_1 = arith.constant 0 : i32
    return %c0_i32, %c0_i32_0 : i32, i32
  }
  func.func @transform_3(%arg0: i32) -> (i32, i32) {
    %c0_i32 = arith.constant 0 : i32
    %c0_i32_0 = arith.constant 0 : i32
    %c0_i32_1 = arith.constant 0 : i32
    return %c0_i32, %c0_i32_0 : i32, i32
  }
  func.func @transform_4(%arg0: i32) -> (i32, i32) {
    %c0_i32 = arith.constant 0 : i32
    %c0_i32_0 = arith.constant 0 : i32
    %c0_i32_1 = arith.constant 0 : i32
    return %c0_i32, %c0_i32_0 : i32, i32
  }
  func.func @transform_5(%arg0: i32) -> (i32, i32) {
    %c0_i32 = arith.constant 0 : i32
    %c0_i32_0 = arith.constant 0 : i32
    return %arg0, %c0_i32 : i32, i32
  }
}

module attributes {stable_mosaic.version = 11 : i64} {
  func.func @ln_qkv_kernel(%arg0: i32, %arg1: memref<16x32xf32, #tpu.memory_space<vmem>>, %arg2: memref<1x32xf32, #tpu.memory_space<vmem>>, %arg3: memref<1x32xf32, #tpu.memory_space<vmem>>, %arg4: memref<32x96xf32, #tpu.memory_space<vmem>>, %arg5: memref<1x96xf32, #tpu.memory_space<vmem>>, %arg6: memref<16x96xf32, #tpu.memory_space<vmem>>) attributes {dimension_semantics = [#tpu.dimension_semantics<parallel>], iteration_bounds = array<i64: 1>, scalar_prefetch = 0 : i64, scratch_operands = 0 : i64, tpu.core_type = #tpu.core_type<tc>, window_params = [{transform_indices = @transform_0, window_bounds = array<i64: 16, 32>}, {pipeline_mode = #tpu.pipeline_mode<synchronous>, transform_indices = @transform_1, window_bounds = array<i64: 1, 32>}, {pipeline_mode = #tpu.pipeline_mode<synchronous>, transform_indices = @transform_2, window_bounds = array<i64: 1, 32>}, {pipeline_mode = #tpu.pipeline_mode<synchronous>, transform_indices = @transform_3, window_bounds = array<i64: 32, 96>}, {pipeline_mode = #tpu.pipeline_mode<synchronous>, transform_indices = @transform_4, window_bounds = array<i64: 1, 96>}, {transform_indices = @transform_5, window_bounds = array<i64: 16, 96>}]} {
    %c0 = arith.constant 0 : index
    %c0_0 = arith.constant 0 : index
    %0 = vector.load %arg1[%c0, %c0_0] : memref<16x32xf32, #tpu.memory_space<vmem>>, vector<16x32xf32>
    %c0_1 = arith.constant 0 : index
    %c0_2 = arith.constant 0 : index
    %1 = vector.load %arg2[%c0_1, %c0_2] : memref<1x32xf32, #tpu.memory_space<vmem>>, vector<1x32xf32>
    %c0_3 = arith.constant 0 : index
    %c0_4 = arith.constant 0 : index
    %2 = vector.load %arg3[%c0_3, %c0_4] : memref<1x32xf32, #tpu.memory_space<vmem>>, vector<1x32xf32>
    %cst = arith.constant dense<0.000000e+00> : vector<16xf32>
    %3 = vector.multi_reduction <add>, %0, %cst [1] : vector<16x32xf32> to vector<16xf32>
    %4 = vector.shape_cast %3 : vector<16xf32> to vector<16x1xf32>
    %cst_5 = arith.constant 3.200000e+01 : f32
    %5 = vector.broadcast %cst_5 : f32 to vector<16x1xf32>
    %6 = arith.divf %4, %5 : vector<16x1xf32>
    %7 = vector.broadcast %6 : vector<16x1xf32> to vector<16x32xf32>
    %8 = arith.subf %0, %7 : vector<16x32xf32>
    %9 = arith.mulf %8, %8 : vector<16x32xf32>
    %cst_6 = arith.constant dense<0.000000e+00> : vector<16xf32>
    %10 = vector.multi_reduction <add>, %9, %cst_6 [1] : vector<16x32xf32> to vector<16xf32>
    %11 = vector.shape_cast %10 : vector<16xf32> to vector<16x1xf32>
    %cst_7 = arith.constant 3.100000e+01 : f32
    %12 = vector.broadcast %cst_7 : f32 to vector<16x1xf32>
    %13 = arith.divf %11, %12 : vector<16x1xf32>
    %14 = math.sqrt %13 : vector<16x1xf32>
    %cst_8 = arith.constant 9.99999997E-7 : f32
    %15 = vector.broadcast %cst_8 : f32 to vector<16x1xf32>
    %16 = arith.addf %14, %15 : vector<16x1xf32>
    %17 = vector.broadcast %16 : vector<16x1xf32> to vector<16x32xf32>
    %18 = arith.divf %8, %17 : vector<16x32xf32>
    %19 = vector.broadcast %1 : vector<1x32xf32> to vector<16x32xf32>
    %20 = arith.mulf %19, %18 : vector<16x32xf32>
    %21 = vector.broadcast %2 : vector<1x32xf32> to vector<16x32xf32>
    %22 = arith.addf %20, %21 : vector<16x32xf32>
    %c0_9 = arith.constant 0 : index
    %c0_10 = arith.constant 0 : index
    %23 = vector.load %arg4[%c0_9, %c0_10] : memref<32x96xf32, #tpu.memory_space<vmem>>, vector<32x96xf32>
    %cst_11 = arith.constant dense<0.000000e+00> : vector<16x96xf32>
    %24 = tpu.matmul %22, %23, %cst_11 {dimension_numbers = #tpu.dot_dimension_numbers<[1], [0], [0], [1], [0, 0, 1, 1], [], []>} : vector<16x32xf32>, vector<32x96xf32>, vector<16x96xf32> -> vector<16x96xf32>
    %c0_12 = arith.constant 0 : index
    %c0_13 = arith.constant 0 : index
    %25 = vector.load %arg5[%c0_12, %c0_13] : memref<1x96xf32, #tpu.memory_space<vmem>>, vector<1x96xf32>
    %26 = vector.broadcast %25 : vector<1x96xf32> to vector<16x96xf32>
    %27 = arith.addf %24, %26 : vector<16x96xf32>
    %c0_14 = arith.constant 0 : index
    %c0_15 = arith.constant 0 : index
    %28 = vector.load %arg6[%c0_14, %c0_15] : memref<16x96xf32, #tpu.memory_space<vmem>>, vector<16x96xf32>
    tpu.vector_store %arg6[%c0_14, %c0_15], %27 {strides = array<i32>} : memref<16x96xf32, #tpu.memory_space<vmem>>, vector<16x96xf32>,
    return
  }
  func.func @transform_0(%arg0: i32) -> (i32, i32) {
    %c0_i32 = arith.constant 0 : i32
    %c0_i32_0 = arith.constant 0 : i32
    return %arg0, %c0_i32 : i32, i32
  }
  func.func @transform_1(%arg0: i32) -> (i32, i32) {
    %c0_i32 = arith.constant 0 : i32
    %c0_i32_0 = arith.constant 0 : i32
    %c0_i32_1 = arith.constant 0 : i32
    return %c0_i32, %c0_i32_0 : i32, i32
  }
  func.func @transform_2(%arg0: i32) -> (i32, i32) {
    %c0_i32 = arith.constant 0 : i32
    %c0_i32_0 = arith.constant 0 : i32
    %c0_i32_1 = arith.constant 0 : i32
    return %c0_i32, %c0_i32_0 : i32, i32
  }
  func.func @transform_3(%arg0: i32) -> (i32, i32) {
    %c0_i32 = arith.constant 0 : i32
    %c0_i32_0 = arith.constant 0 : i32
    %c0_i32_1 = arith.constant 0 : i32
    return %c0_i32, %c0_i32_0 : i32, i32
  }
  func.func @transform_4(%arg0: i32) -> (i32, i32) {
    %c0_i32 = arith.constant 0 : i32
    %c0_i32_0 = arith.constant 0 : i32
    %c0_i32_1 = arith.constant 0 : i32
    return %c0_i32, %c0_i32_0 : i32, i32
  }
  func.func @transform_5(%arg0: i32) -> (i32, i32) {
    %c0_i32 = arith.constant 0 : i32
    %c0_i32_0 = arith.constant 0 : i32
    return %arg0, %c0_i32 : i32, i32
  }
}

</mosaic_0001>

<llo_original>
// kernel: tpu_custom_call.1
$region0: #{tpu_custom_call.1}
  #allocation0 [shape = 'u32[]', space=smem, size = 0x4, offset = 0x4, fixed_abs, tag = 'smem constant byte address 0x4 - core index']
  #allocation1 [shape = 'u32[144,128]{1,0:T(1,128)}', space=vmem, size = 0x12000, scoped, tag = 'internal scratch']
  %s0 = inlined_call_operand.hbm [shape: f32[16,32], index: 0, kind: input, shape index: {}]
  %s1 = inlined_call_operand.vmem [shape: f32[1,32], index: 1, kind: input, shape index: {}]
  %s2 = inlined_call_operand.vmem [shape: f32[1,32], index: 2, kind: input, shape index: {}]
  %s3 = inlined_call_operand.hbm [shape: f32[32,96], index: 3, kind: input, shape index: {}]
  %s4 = inlined_call_operand.vmem [shape: f32[1,96], index: 4, kind: input, shape index: {}]
  %s5 = inlined_call_operand.hbm [shape: f32[16,96], index: 5, kind: output, shape index: {}]
  %s6 = sld [smem:[#allocation0]]
  $region38: #{tpu_custom_call.1} parent=0
    _
  %s8 = ssub.s32 1, %s6
  %s9 = scalar_select 0, %s8, %s6
  $region1: #{tpu_custom_call.1} parent=0
    #allocation2 [shape = 'u8[8192]{0}', space=vmem, size = 0x2000, scoped, tag = 'input window, operand 0, single buffered']
    #allocation3 [shape = 's32[1]{0}', space=sflag, size = 0x4, scoped, tag = 'scoped memory for tpu_custom_call.1']
    #allocation4 [shape = 's32[1]{0}', space=sflag, size = 0x4, scoped, tag = 'scoped memory for tpu_custom_call.1']
    #allocation5 [shape = 'u8[16384]{0}', space=vmem, size = 0x4000, scoped, tag = 'input window, operand 3, single buffered']
    #allocation6 [shape = 's32[1]{0}', space=sflag, size = 0x4, scoped, tag = 'scoped memory for tpu_custom_call.1']
    #allocation7 [shape = 'u8[8192]{0}', space=vmem, size = 0x2000, scoped, tag = 'output window, operand 0, single buffered']
    %10 = vsyncpa [#allocation3], 0
    %11 = vsyncpa [#allocation6], 0
    %12 = vsyncpa [#allocation4], 0
    // Predicated region
    $region2: #{tpu_custom_call.1} parent=1 // pred_check
      _
    $region3: #{tpu_custom_call.1} parent=1 // pred_check_branch
      %14 = sbr.rel (0) target = $region5
    $region4: #{tpu_custom_call.1} parent=1 // pred_region
      %s16 = ssub.s32 256, 256
      %17 = vsyncadd [#allocation3], %s16
      %s18 = sshll.u32 [#allocation2], 4
      %s19 = int_to_ptr.vmem [resolvable:$true] %s18
      %24 = dma.hbm_to_vmem [thread:$0]  %s0, 256, %s19, [#allocation3], 128, 128, 8
    $region5: #{tpu_custom_call.1} parent=1 // pred_fallthru
      _
    // Predicated region
    $region6: #{tpu_custom_call.1} parent=1 // pred_check
      _
    $region7: #{tpu_custom_call.1} parent=1 // pred_check_branch
      %26 = sbr.rel (0) target = $region9
    $region8: #{tpu_custom_call.1} parent=1 // pred_region
      _
    $region9: #{tpu_custom_call.1} parent=1 // pred_fallthru
      _
    // Predicated region
    $region10: #{tpu_custom_call.1} parent=1 // pred_check
      _
    $region11: #{tpu_custom_call.1} parent=1 // pred_check_branch
      %28 = sbr.rel (0) target = $region13
    $region12: #{tpu_custom_call.1} parent=1 // pred_region
      _
    $region13: #{tpu_custom_call.1} parent=1 // pred_fallthru
      _
    // Predicated region
    $region14: #{tpu_custom_call.1} parent=1 // pred_check
      _
    $region15: #{tpu_custom_call.1} parent=1 // pred_check_branch
      %30 = sbr.rel (0) target = $region17
    $region16: #{tpu_custom_call.1} parent=1 // pred_region
      %s32 = ssub.s32 512, 512
      %33 = vsyncadd [#allocation6], %s32
      %s34 = sshll.u32 [#allocation5], 4
      %s35 = int_to_ptr.vmem [resolvable:$true] %s34
      %40 = dma.hbm_to_vmem [thread:$0]  %s3, 512, %s35, [#allocation6], 128, 128, 8
    $region17: #{tpu_custom_call.1} parent=1 // pred_fallthru
      _
    // Predicated region
    $region18: #{tpu_custom_call.1} parent=1 // pred_check
      _
    $region19: #{tpu_custom_call.1} parent=1 // pred_check_branch
      %42 = sbr.rel (0) target = $region21
    $region20: #{tpu_custom_call.1} parent=1 // pred_region
      _
    $region21: #{tpu_custom_call.1} parent=1 // pred_fallthru
      _
    // Predicated region
    $region22: #{tpu_custom_call.1} parent=1 // pred_check
      _
    $region23: #{tpu_custom_call.1} parent=1 // pred_check_branch
      %44 = sbr.rel (0) target = $region25
    $region24: #{tpu_custom_call.1} parent=1 // pred_region
      %45 = dma.done [#allocation3], 256
    $region25: #{tpu_custom_call.1} parent=1 // pred_fallthru
      _
    // Predicated region
    $region26: #{tpu_custom_call.1} parent=1 // pred_check
      _
    $region27: #{tpu_custom_call.1} parent=1 // pred_check_branch
      %47 = sbr.rel (0) target = $region29
    $region28: #{tpu_custom_call.1} parent=1 // pred_region
      %48 = dma.done [#allocation6], 512
    $region29: #{tpu_custom_call.1} parent=1 // pred_fallthru
      _
    %v49 = vld [vmem:[#allocation2] sm:$0xff]
    %v50 = vld [vmem:[#allocation2 + $0x8] sm:$0xff]
    %v51 = vld [vmem:[%s1] sm:$0x1]
    %v52 = vld [vmem:[%s2] sm:$0x1]
    %vm53 = vcmask 261120
    %v54 = vsel %vm53, %v49, 0.0
    %55 = vadd.xlane.f32.xlu0 %v54
    %v56 = vpop.xlane.xlu0 %55
    %v57 = vsel %vm53, %v50, 0.0
    %58 = vadd.xlane.f32.xlu0 %v57
    %v59 = vpop.xlane.xlu0 %58
    %v60 = vrcp.pop 32.0
    %v61 = vmul.f32 %v56, %v60
    %v62 = vmul.f32 %v59, %v60
    %v63 = vsub.f32 %v49, %v61
    %v64 = vsub.f32 %v50, %v62
    %v65 = vmul.f32 %v63, %v63
    %v66 = vmul.f32 %v64, %v64
    %v67 = vsel %vm53, %v65, 0.0
    %68 = vadd.xlane.f32.xlu0 %v67
    %v69 = vpop.xlane.xlu0 %68
    %v70 = vsel %vm53, %v66, 0.0
    %71 = vadd.xlane.f32.xlu0 %v70
    %v72 = vpop.xlane.xlu0 %71
    %v73 = vrcp.pop 31.0
    %v74 = vmul.f32 %v69, %v73
    %v75 = vmul.f32 %v72, %v73
    %v76 = vrsqrt.pop %v74
    %v77 = vmul.f32 %v74, %v76
    %vm78 = vcmp.eq.f32.partialorder %v74, inf
    %v79 = vsel %vm78, %v74, %v77
    %vm80 = vcmp.eq.f32.partialorder %v74, 0.0
    %v81 = vand.u32 %v74, 2147483648
    %v82 = vsel %vm80, %v81, %v79
    %v83 = vrsqrt.pop %v75
    %v84 = vmul.f32 %v75, %v83
    %vm85 = vcmp.eq.f32.partialorder %v75, inf
    %v86 = vsel %vm85, %v75, %v84
    %vm87 = vcmp.eq.f32.partialorder %v75, 0.0
    %v88 = vand.u32 %v75, 2147483648
    %v89 = vsel %vm87, %v88, %v86
    %v90 = vadd.f32 %v82, 1e-06
    %v91 = vadd.f32 %v89, 1e-06
    %v92 = vrcp.pop %v90
    %v93 = vmul.f32 %v63, %v92
    %v94 = vrcp.pop %v91
    %v95 = vmul.f32 %v64, %v94
    %v97 = vlaneseq
    %v98 = vshrl.u32 %v97, 7
    %v99 = vsub.s32 0, %v98
    %v100 = vrot.slane %v51, %v99
    %v102 = vmul.f32 %v100, %v93
    %v103 = vmul.f32 %v100, %v95
    %v105 = vlaneseq
    %v106 = vshrl.u32 %v105, 7
    %v107 = vsub.s32 0, %v106
    %v108 = vrot.slane %v52, %v107
    %v110 = vadd.f32 %v102, %v108
    %v111 = vadd.f32 %v103, %v108
    %v112 = vld [vmem:[#allocation5] sm:$0xff]
    %v113 = vld [vmem:[#allocation5 + $0x8] sm:$0xff]
    %v114 = vld [vmem:[#allocation5 + $0x10] sm:$0xff]
    %v115 = vld [vmem:[#allocation5 + $0x18] sm:$0xff]
    %v116 = vld [vmem:[%s4] sm:$0x1]
    %v118 = vlaneseq
    %v119 = vshrl.u32 %v118, 7
    %v120 = vsub.s32 0, %v119
    %v121 = vrot.slane %v116, %v120
    %v124 = vsel %vm53, %v110, 0
    %v127 = vsel %vm53, %v111, 0
    %129 = vmatprep.subr.mxu0 0.0
    %130 = vmatpush1.msra.mxu0 0.0
    %131 = vmatprep.subr.mxu0 0.0
    %132 = vmatpush1.msra.mxu0 0.0
    %133 = vmatprep.subr.mxu0 0.0
    %134 = vmatpush1.msra.mxu0 0.0
    %135 = vmatprep.subr.mxu0 0.0
    %136 = vmatpush1.msra.mxu0 0.0
    %137 = vmatprep.subr.mxu0 0.0
    %138 = vmatpush1.msra.mxu0 0.0
    %139 = vmatprep.subr.mxu0 0.0
    %140 = vmatpush1.msra.mxu0 0.0
    %141 = vmatprep.subr.mxu0 0.0
    %142 = vmatpush1.msra.mxu0 0.0
    %143 = vmatprep.subr.mxu0 0.0
    %144 = vmatpush1.msra.mxu0 0.0
    %145 = vmatprep.subr.mxu0 0.0
    %146 = vmatpush1.msra.mxu0 0.0
    %147 = vmatprep.subr.mxu0 0.0
    %148 = vmatpush1.msra.mxu0 0.0
    %149 = vmatprep.subr.mxu0 0.0
    %150 = vmatpush1.msra.mxu0 0.0
    %151 = vmatprep.subr.mxu0 0.0
    %152 = vmatpush1.msra.mxu0 0.0
    %153 = vmatprep.subr.mxu0 0.0
    %154 = vmatpush1.msra.mxu0 %v115
    %155 = vmatprep.subr.mxu0 0.0
    %156 = vmatpush1.msra.mxu0 %v114
    %157 = vmatprep.subr.mxu0 0.0
    %158 = vmatpush1.msra.mxu0 %v113
    %159 = vmatprep.subr.mxu0 0.0
    %160 = vmatpush1.msra.mxu0 %v112
    %161 = vmatprep.subr.mxu0 0.0
    %162 = vmatpush2.msra.mxu0 0.0
    %163 = vmatprep.subr.mxu0 0.0
    %164 = vmatpush2.msra.mxu0 0.0
    %165 = vmatprep.subr.mxu0 0.0
    %166 = vmatpush2.msra.mxu0 0.0
    %167 = vmatprep.subr.mxu0 0.0
    %168 = vmatpush2.msra.mxu0 0.0
    %169 = vmatprep.subr.mxu0 0.0
    %170 = vmatpush2.msra.mxu0 0.0
    %171 = vmatprep.subr.mxu0 0.0
    %172 = vmatpush2.msra.mxu0 0.0
    %173 = vmatprep.subr.mxu0 0.0
    %174 = vmatpush2.msra.mxu0 0.0
    %175 = vmatprep.subr.mxu0 0.0
    %176 = vmatpush2.msra.mxu0 0.0
    %177 = vmatprep.subr.mxu0 0.0
    %178 = vmatpush2.msra.mxu0 0.0
    %179 = vmatprep.subr.mxu0 0.0
    %180 = vmatpush2.msra.mxu0 0.0
    %181 = vmatprep.subr.mxu0 0.0
    %182 = vmatpush2.msra.mxu0 0.0
    %183 = vmatprep.subr.mxu0 0.0
    %184 = vmatpush2.msra.mxu0 0.0
    %185 = vmatprep.subr.mxu0 0.0
    %186 = vmatpush2.msra.mxu0 0.0
    %187 = vmatprep.subr.mxu0 0.0
    %188 = vmatpush2.msra.mxu0 0.0
    %189 = vmatprep.subr.mxu0 0.0
    %190 = vmatpush2.msra.mxu0 0.0
    %191 = vmatprep.subr.mxu0 0.0
    %192 = vmatpush2.msra.mxu0 0.0
    %193 = vmatprep.mubr.f32.mxu0 0.0
    %194 = vmatmul.mubr.f32.gmra.mxu0 %v124
    %v195 = vpop.f32.mrf.mxu0
    %v196 = vadd.f32 %v121, %v195
    %v197 = vpop.f32.mrf.mxu0
    %198 = vmatprep.mubr.f32.mxu0 0.0
    %199 = vmatmul.mubr.f32.gmra.mxu0 %v127
    %v200 = vpop.f32.mrf.mxu0
    %v201 = vadd.f32 %v121, %v200
    %v202 = vpop.f32.mrf.mxu0
    %203 = vdwg.mxu0
    %vm204 = vcmask 785408
    %205 = vst.msk [vmem:[#allocation7] sm:$0xff] %vm204, %v196
    %206 = vst.msk [vmem:[#allocation7 + $0x8] sm:$0xff] %vm204, %v201
    // Predicated region
    $region30: #{tpu_custom_call.1} parent=1 // pred_check
      _
    $region31: #{tpu_custom_call.1} parent=1 // pred_check_branch
      %208 = sbr.rel (0) target = $region33
    $region32: #{tpu_custom_call.1} parent=1 // pred_region
      %s210 = ssub.s32 256, 256
      %211 = vsyncadd [#allocation4], %s210
      %s212 = sshll.u32 [#allocation7], 4
      %s213 = int_to_ptr.vmem [resolvable:$true] %s212
      %218 = dma.vmem_to_hbm [thread:$0]  %s213, 256, %s5, [#allocation4], 128, 128, 8
    $region33: #{tpu_custom_call.1} parent=1 // pred_fallthru
      _
    // Predicated region
    $region34: #{tpu_custom_call.1} parent=1 // pred_check
      _
    $region35: #{tpu_custom_call.1} parent=1 // pred_check_branch
      %220 = sbr.rel (0) target = $region37
    $region36: #{tpu_custom_call.1} parent=1 // pred_region
      %221 = dma.done [#allocation4], 256
    $region37: #{tpu_custom_call.1} parent=1 // pred_fallthru
      _
    %222 = vsyncpa [#allocation3], 1
    %223 = vsyncpa [#allocation6], 1
    %224 = vsyncpa [#allocation4], 1

// kernel: tpu_custom_call.1
$region0: #{tpu_custom_call.1}
  #allocation0 [shape = 'u32[]', space=smem, size = 0x4, offset = 0x4, fixed_abs, tag = 'smem constant byte address 0x4 - core index']
  #allocation1 [shape = 'u32[144,128]{1,0:T(1,128)}', space=vmem, size = 0x12000, scoped, tag = 'internal scratch']
  %s0 = inlined_call_operand.hbm [shape: f32[16,32], index: 0, kind: input, shape index: {}]
  %s1 = inlined_call_operand.vmem [shape: f32[1,32], index: 1, kind: input, shape index: {}]
  %s2 = inlined_call_operand.vmem [shape: f32[1,32], index: 2, kind: input, shape index: {}]
  %s3 = inlined_call_operand.hbm [shape: f32[32,96], index: 3, kind: input, shape index: {}]
  %s4 = inlined_call_operand.vmem [shape: f32[1,96], index: 4, kind: input, shape index: {}]
  %s5 = inlined_call_operand.hbm [shape: f32[16,96], index: 5, kind: output, shape index: {}]
  %s6 = sld [smem:[#allocation0]]
  $region38: #{tpu_custom_call.1} parent=0
    _
  %s8 = ssub.s32 1, %s6
  %s9 = scalar_select 0, %s8, %s6
  $region1: #{tpu_custom_call.1} parent=0
    #allocation2 [shape = 'u8[8192]{0}', space=vmem, size = 0x2000, scoped, tag = 'input window, operand 0, single buffered']
    #allocation3 [shape = 's32[1]{0}', space=sflag, size = 0x4, scoped, tag = 'scoped memory for tpu_custom_call.1']
    #allocation4 [shape = 's32[1]{0}', space=sflag, size = 0x4, scoped, tag = 'scoped memory for tpu_custom_call.1']
    #allocation5 [shape = 'u8[16384]{0}', space=vmem, size = 0x4000, scoped, tag = 'input window, operand 3, single buffered']
    #allocation6 [shape = 's32[1]{0}', space=sflag, size = 0x4, scoped, tag = 'scoped memory for tpu_custom_call.1']
    #allocation7 [shape = 'u8[8192]{0}', space=vmem, size = 0x2000, scoped, tag = 'output window, operand 0, single buffered']
    %10 = vsyncpa [#allocation3], 0
    %11 = vsyncpa [#allocation6], 0
    %12 = vsyncpa [#allocation4], 0
    // Predicated region
    $region2: #{tpu_custom_call.1} parent=1 // pred_check
      _
    $region3: #{tpu_custom_call.1} parent=1 // pred_check_branch
      %14 = sbr.rel (0) target = $region5
    $region4: #{tpu_custom_call.1} parent=1 // pred_region
      %s16 = ssub.s32 256, 256
      %17 = vsyncadd [#allocation3], %s16
      %s18 = sshll.u32 [#allocation2], 4
      %s19 = int_to_ptr.vmem [resolvable:$true] %s18
      %24 = dma.hbm_to_vmem [thread:$0]  %s0, 256, %s19, [#allocation3], 128, 128, 8
    $region5: #{tpu_custom_call.1} parent=1 // pred_fallthru
      _
    // Predicated region
    $region6: #{tpu_custom_call.1} parent=1 // pred_check
      _
    $region7: #{tpu_custom_call.1} parent=1 // pred_check_branch
      %26 = sbr.rel (0) target = $region9
    $region8: #{tpu_custom_call.1} parent=1 // pred_region
      _
    $region9: #{tpu_custom_call.1} parent=1 // pred_fallthru
      _
    // Predicated region
    $region10: #{tpu_custom_call.1} parent=1 // pred_check
      _
    $region11: #{tpu_custom_call.1} parent=1 // pred_check_branch
      %28 = sbr.rel (0) target = $region13
    $region12: #{tpu_custom_call.1} parent=1 // pred_region
      _
    $region13: #{tpu_custom_call.1} parent=1 // pred_fallthru
      _
    // Predicated region
    $region14: #{tpu_custom_call.1} parent=1 // pred_check
      _
    $region15: #{tpu_custom_call.1} parent=1 // pred_check_branch
      %30 = sbr.rel (0) target = $region17
    $region16: #{tpu_custom_call.1} parent=1 // pred_region
      %s32 = ssub.s32 512, 512
      %33 = vsyncadd [#allocation6], %s32
      %s34 = sshll.u32 [#allocation5], 4
      %s35 = int_to_ptr.vmem [resolvable:$true] %s34
      %40 = dma.hbm_to_vmem [thread:$0]  %s3, 512, %s35, [#allocation6], 128, 128, 8
    $region17: #{tpu_custom_call.1} parent=1 // pred_fallthru
      _
    // Predicated region
    $region18: #{tpu_custom_call.1} parent=1 // pred_check
      _
    $region19: #{tpu_custom_call.1} parent=1 // pred_check_branch
      %42 = sbr.rel (0) target = $region21
    $region20: #{tpu_custom_call.1} parent=1 // pred_region
      _
    $region21: #{tpu_custom_call.1} parent=1 // pred_fallthru
      _
    // Predicated region
    $region22: #{tpu_custom_call.1} parent=1 // pred_check
      _
    $region23: #{tpu_custom_call.1} parent=1 // pred_check_branch
      %44 = sbr.rel (0) target = $region25
    $region24: #{tpu_custom_call.1} parent=1 // pred_region
      %45 = dma.done [#allocation3], 256
    $region25: #{tpu_custom_call.1} parent=1 // pred_fallthru
      _
    // Predicated region
    $region26: #{tpu_custom_call.1} parent=1 // pred_check
      _
    $region27: #{tpu_custom_call.1} parent=1 // pred_check_branch
      %47 = sbr.rel (0) target = $region29
    $region28: #{tpu_custom_call.1} parent=1 // pred_region
      %48 = dma.done [#allocation6], 512
    $region29: #{tpu_custom_call.1} parent=1 // pred_fallthru
      _
    %v49 = vld [vmem:[#allocation2] sm:$0xff]
    %v50 = vld [vmem:[#allocation2 + $0x8] sm:$0xff]
    %v51 = vld [vmem:[%s1] sm:$0x1]
    %v52 = vld [vmem:[%s2] sm:$0x1]
    %vm53 = vcmask 261120
    %v54 = vsel %vm53, %v49, 0.0
    %55 = vadd.xlane.f32.xlu0 %v54
    %v56 = vpop.xlane.xlu0 %55
    %v57 = vsel %vm53, %v50, 0.0
    %58 = vadd.xlane.f32.xlu0 %v57
    %v59 = vpop.xlane.xlu0 %58
    %v60 = vrcp.pop 32.0
    %v61 = vmul.f32 %v56, %v60
    %v62 = vmul.f32 %v59, %v60
    %v63 = vsub.f32 %v49, %v61
    %v64 = vsub.f32 %v50, %v62
    %v65 = vmul.f32 %v63, %v63
    %v66 = vmul.f32 %v64, %v64
    %v67 = vsel %vm53, %v65, 0.0
    %68 = vadd.xlane.f32.xlu0 %v67
    %v69 = vpop.xlane.xlu0 %68
    %v70 = vsel %vm53, %v66, 0.0
    %71 = vadd.xlane.f32.xlu0 %v70
    %v72 = vpop.xlane.xlu0 %71
    %v73 = vrcp.pop 31.0
    %v74 = vmul.f32 %v69, %v73
    %v75 = vmul.f32 %v72, %v73
    %v76 = vrsqrt.pop %v74
    %v77 = vmul.f32 %v74, %v76
    %vm78 = vcmp.eq.f32.partialorder %v74, inf
    %v79 = vsel %vm78, %v74, %v77
    %vm80 = vcmp.eq.f32.partialorder %v74, 0.0
    %v81 = vand.u32 %v74, 2147483648
    %v82 = vsel %vm80, %v81, %v79
    %v83 = vrsqrt.pop %v75
    %v84 = vmul.f32 %v75, %v83
    %vm85 = vcmp.eq.f32.partialorder %v75, inf
    %v86 = vsel %vm85, %v75, %v84
    %vm87 = vcmp.eq.f32.partialorder %v75, 0.0
    %v88 = vand.u32 %v75, 2147483648
    %v89 = vsel %vm87, %v88, %v86
    %v90 = vadd.f32 %v82, 1e-06
    %v91 = vadd.f32 %v89, 1e-06
    %v92 = vrcp.pop %v90
    %v93 = vmul.f32 %v63, %v92
    %v94 = vrcp.pop %v91
    %v95 = vmul.f32 %v64, %v94
    %v97 = vlaneseq
    %v98 = vshrl.u32 %v97, 7
    %v99 = vsub.s32 0, %v98
    %v100 = vrot.slane %v51, %v99
    %v102 = vmul.f32 %v100, %v93
    %v103 = vmul.f32 %v100, %v95
    %v105 = vlaneseq
    %v106 = vshrl.u32 %v105, 7
    %v107 = vsub.s32 0, %v106
    %v108 = vrot.slane %v52, %v107
    %v110 = vadd.f32 %v102, %v108
    %v111 = vadd.f32 %v103, %v108
    %v112 = vld [vmem:[#allocation5] sm:$0xff]
    %v113 = vld [vmem:[#allocation5 + $0x8] sm:$0xff]
    %v114 = vld [vmem:[#allocation5 + $0x10] sm:$0xff]
    %v115 = vld [vmem:[#allocation5 + $0x18] sm:$0xff]
    %v116 = vld [vmem:[%s4] sm:$0x1]
    %v118 = vlaneseq
    %v119 = vshrl.u32 %v118, 7
    %v120 = vsub.s32 0, %v119
    %v121 = vrot.slane %v116, %v120
    %v124 = vsel %vm53, %v110, 0
    %v127 = vsel %vm53, %v111, 0
    %129 = vmatprep.subr.mxu0 0.0
    %130 = vmatpush1.msra.mxu0 0.0
    %131 = vmatprep.subr.mxu0 0.0
    %132 = vmatpush1.msra.mxu0 0.0
    %133 = vmatprep.subr.mxu0 0.0
    %134 = vmatpush1.msra.mxu0 0.0
    %135 = vmatprep.subr.mxu0 0.0
    %136 = vmatpush1.msra.mxu0 0.0
    %137 = vmatprep.subr.mxu0 0.0
    %138 = vmatpush1.msra.mxu0 0.0
    %139 = vmatprep.subr.mxu0 0.0
    %140 = vmatpush1.msra.mxu0 0.0
    %141 = vmatprep.subr.mxu0 0.0
    %142 = vmatpush1.msra.mxu0 0.0
    %143 = vmatprep.subr.mxu0 0.0
    %144 = vmatpush1.msra.mxu0 0.0
    %145 = vmatprep.subr.mxu0 0.0
    %146 = vmatpush1.msra.mxu0 0.0
    %147 = vmatprep.subr.mxu0 0.0
    %148 = vmatpush1.msra.mxu0 0.0
    %149 = vmatprep.subr.mxu0 0.0
    %150 = vmatpush1.msra.mxu0 0.0
    %151 = vmatprep.subr.mxu0 0.0
    %152 = vmatpush1.msra.mxu0 0.0
    %153 = vmatprep.subr.mxu0 0.0
    %154 = vmatpush1.msra.mxu0 %v115
    %155 = vmatprep.subr.mxu0 0.0
    %156 = vmatpush1.msra.mxu0 %v114
    %157 = vmatprep.subr.mxu0 0.0
    %158 = vmatpush1.msra.mxu0 %v113
    %159 = vmatprep.subr.mxu0 0.0
    %160 = vmatpush1.msra.mxu0 %v112
    %161 = vmatprep.subr.mxu0 0.0
    %162 = vmatpush2.msra.mxu0 0.0
    %163 = vmatprep.subr.mxu0 0.0
    %164 = vmatpush2.msra.mxu0 0.0
    %165 = vmatprep.subr.mxu0 0.0
    %166 = vmatpush2.msra.mxu0 0.0
    %167 = vmatprep.subr.mxu0 0.0
    %168 = vmatpush2.msra.mxu0 0.0
    %169 = vmatprep.subr.mxu0 0.0
    %170 = vmatpush2.msra.mxu0 0.0
    %171 = vmatprep.subr.mxu0 0.0
    %172 = vmatpush2.msra.mxu0 0.0
    %173 = vmatprep.subr.mxu0 0.0
    %174 = vmatpush2.msra.mxu0 0.0
    %175 = vmatprep.subr.mxu0 0.0
    %176 = vmatpush2.msra.mxu0 0.0
    %177 = vmatprep.subr.mxu0 0.0
    %178 = vmatpush2.msra.mxu0 0.0
    %179 = vmatprep.subr.mxu0 0.0
    %180 = vmatpush2.msra.mxu0 0.0
    %181 = vmatprep.subr.mxu0 0.0
    %182 = vmatpush2.msra.mxu0 0.0
    %183 = vmatprep.subr.mxu0 0.0
    %184 = vmatpush2.msra.mxu0 0.0
    %185 = vmatprep.subr.mxu0 0.0
    %186 = vmatpush2.msra.mxu0 0.0
    %187 = vmatprep.subr.mxu0 0.0
    %188 = vmatpush2.msra.mxu0 0.0
    %189 = vmatprep.subr.mxu0 0.0
    %190 = vmatpush2.msra.mxu0 0.0
    %191 = vmatprep.subr.mxu0 0.0
    %192 = vmatpush2.msra.mxu0 0.0
    %193 = vmatprep.mubr.f32.mxu0 0.0
    %194 = vmatmul.mubr.f32.gmra.mxu0 %v124
    %v195 = vpop.f32.mrf.mxu0
    %v196 = vadd.f32 %v121, %v195
    %v197 = vpop.f32.mrf.mxu0
    %198 = vmatprep.mubr.f32.mxu0 0.0
    %199 = vmatmul.mubr.f32.gmra.mxu0 %v127
    %v200 = vpop.f32.mrf.mxu0
    %v201 = vadd.f32 %v121, %v200
    %v202 = vpop.f32.mrf.mxu0
    %203 = vdwg.mxu0
    %vm204 = vcmask 785408
    %205 = vst.msk [vmem:[#allocation7] sm:$0xff] %vm204, %v196
    %206 = vst.msk [vmem:[#allocation7 + $0x8] sm:$0xff] %vm204, %v201
    // Predicated region
    $region30: #{tpu_custom_call.1} parent=1 // pred_check
      _
    $region31: #{tpu_custom_call.1} parent=1 // pred_check_branch
      %208 = sbr.rel (0) target = $region33
    $region32: #{tpu_custom_call.1} parent=1 // pred_region
      %s210 = ssub.s32 256, 256
      %211 = vsyncadd [#allocation4], %s210
      %s212 = sshll.u32 [#allocation7], 4
      %s213 = int_to_ptr.vmem [resolvable:$true] %s212
      %218 = dma.vmem_to_hbm [thread:$0]  %s213, 256, %s5, [#allocation4], 128, 128, 8
    $region33: #{tpu_custom_call.1} parent=1 // pred_fallthru
      _
    // Predicated region
    $region34: #{tpu_custom_call.1} parent=1 // pred_check
      _
    $region35: #{tpu_custom_call.1} parent=1 // pred_check_branch
      %220 = sbr.rel (0) target = $region37
    $region36: #{tpu_custom_call.1} parent=1 // pred_region
      %221 = dma.done [#allocation4], 256
    $region37: #{tpu_custom_call.1} parent=1 // pred_fallthru
      _
    %222 = vsyncpa [#allocation3], 1
    %223 = vsyncpa [#allocation6], 1
    %224 = vsyncpa [#allocation4], 1

</llo_original>
